<compile_context>
chip_gen: v6e
topology: v6e:2x2x1
jax: 0.10.0
libtpu: 0.0.40
codegen_flags: <defaults>
</compile_context>

<pallas_src>
import jax
import jax.numpy as jnp
from jax import lax
from jax.experimental import pallas as pl
from jax.experimental.pallas import tpu as pltpu


def _round_up(x, m):
    return ((x + m - 1) // m) * m


def _cdiv(a, b):
    return (a + b - 1) // b


def _vmem_capacity_bytes():
    try:
        return int(pltpu.get_tpu_info().vmem_capacity_bytes)
    except Exception:
        return 64 << 20  # conservative default: v7x per-TensorCore VMEM


def _choose_bm_tile(B):
    """Pick a batch tile: large enough to amortize per-grid-step overhead and
    fill MXU rows, small enough to limit padding waste, and >= 2 tiles when the
    batch allows (so v7x's second TensorCore has work on the parallel axis)."""
    B8 = _round_up(max(B, 1), 8)
    if B8 <= 16:
        return B8
    cands = {1024, 512, 256, 128, 64, 32, 16}
    cands.add(_round_up(_cdiv(B, 2), 8))   # two-tile split of the whole batch
    cands.add(min(B8, 1024))               # whole batch in one tile
    best = None
    for t in sorted(cands):
        if t < 8 or t > 1024:
            continue
        n = _cdiv(B, t)
        waste = n * t - B
        # minimize padding; among ties prefer >=2 tiles (megacore), then bigger tiles
        key = (waste, 1 if n == 1 else 0, -t)
        if best is None or key < best[0]:
            best = (key, t)
    return best[1]


# ----------------------------------------------------------------------------
# Kernels
# ----------------------------------------------------------------------------

def _make_fused_kernel(n_mid):
    """Whole network per batch tile; mid-weight stack resident in VMEM."""

    def kernel(c_ref, k_ref, w0c_ref, w0k_ref, b0_ref, *rest):
        if n_mid > 0:
            wm_ref, bm_ref, wl_ref, bl_ref, o_ref = rest
        else:
            wl_ref, bl_ref, o_ref = rest

        # layer 0: h = relu(c @ W0c + k @ W0k + b0)   (bf16/f32 operands -> f32 acc)
        h = jnp.dot(c_ref[...], w0c_ref[...], preferred_element_type=jnp.float32)
        h = h + jnp.dot(k_ref[...], w0k_ref[...], preferred_element_type=jnp.float32)
        h = jnp.maximum(h + b0_ref[...].astype(jnp.float32), 0.0)

        if n_mid > 0:
            # residual mid layers, unrolled in-kernel (no per-depth grid steps)
            def body(d, h):
                y = jnp.dot(h, wm_ref[d], preferred_element_type=jnp.float32)
                y = y + bm_ref[d].astype(jnp.float32)
                return jnp.maximum(h + y, 0.0)

            h = lax.fori_loop(0, n_mid, body, h, unroll=True)

        # last layer + tanh; store only the true P columns (no lane padding).
        out = jnp.dot(h, wl_ref[...], preferred_element_type=jnp.float32)
        out = out + bl_ref[...].astype(jnp.float32)
        o_ref[...] = jnp.tanh(out).astype(o_ref.dtype)

    return kernel


def _stream_kernel(c_ref, k_ref, w0c_ref, w0k_ref, b0_ref, wm_ref, bm_ref,
                   wl_ref, bl_ref, o_ref, h_ref):
    """Fallback for very large H/depth: one (H, H) mid slab per grid step.

    wm_ref: (H, H) slab d (leading dim squeezed)   bm_ref: (1, H)
    h_ref : VMEM scratch (bm_tile, H), persists across the depth axis.
    """
    d = pl.program_id(1)

    @pl.when(d == 0)
    def _():
        h0 = jnp.dot(c_ref[...], w0c_ref[...], preferred_element_type=jnp.float32)
        h0 = h0 + jnp.dot(k_ref[...], w0k_ref[...], preferred_element_type=jnp.float32)
        h_ref[...] = jnp.maximum(h0 + b0_ref[...].astype(jnp.float32), 0.0)

    h = h_ref[...]
    y = jnp.dot(h, wm_ref[...], preferred_element_type=jnp.float32)
    y = y + bm_ref[...].astype(jnp.float32)
    h = jnp.maximum(h + y, 0.0)
    h_ref[...] = h

    @pl.when(d == pl.num_programs(1) - 1)
    def _():
        out = jnp.dot(h, wl_ref[...], preferred_element_type=jnp.float32)
        out = out + bl_ref[...].astype(jnp.float32)
        o_ref[...] = jnp.tanh(out).astype(o_ref.dtype)


# ----------------------------------------------------------------------------
# Wrapper
# ----------------------------------------------------------------------------

def bob_forward(c, k, params, *, bm_tile=None, force_stream=False):
    """Bob forward: tanh(last( relu-residual-MLP( [c, k] ) ))."""
    w0, b0, wm, bm, wl, bl = params
    B, CIPHER = c.shape
    KEY = k.shape[-1]
    IN = CIPHER + KEY
    H = w0.shape[1]
    P = wl.shape[1]
    n_mid = wm.shape[0]

    # Split W0 so layer 0 is c@W0c + k@W0k + b0 (no HBM concat of activations).
    w0c = w0[:CIPHER]
    w0k = w0[CIPHER:]

    # ---- batch tiling (pad B to a tile multiple; no divisibility assert) ----
    if bm_tile is None:
        bm_tile = _choose_bm_tile(B)
    bm_tile = max(8, _round_up(min(bm_tile, _round_up(B, 8)), 8))
    B_pad = _round_up(B, bm_tile)
    if B_pad != B:
        c = jnp.pad(c, ((0, B_pad - B), (0, 0)))
        k = jnp.pad(k, ((0, B_pad - B), (0, 0)))
    n_tiles = B_pad // bm_tile

    a_isz = c.dtype.itemsize
    w_isz = w0.dtype.itemsize

    # ---- VMEM budgeting (re-derived per generation: 64 MiB v7x, 128 MiB else) ----
    cap = _vmem_capacity_bytes()
    budget = int(0.75 * cap)
    # x2 buffers on every BlockSpec-managed block; hidden act in f32.
    act_bytes = (2 * bm_tile * (CIPHER + KEY) * a_isz
                 + 2 * bm_tile * P * a_isz
                 + bm_tile * H * 4)
    fixed_w_bytes = 2 * ((IN + 1) * H + H * P + P) * w_isz
    mid_stack_bytes = 2 * n_mid * (H * H + H) * w_isz       # resident stack
    mid_slab_bytes = 2 * (H * H + H) * w_isz                 # streamed slab

    fused = (n_mid == 0) or (
        (not force_stream)
        and (act_bytes + fixed_w_bytes + mid_stack_bytes <= budget))

    if fused:
        kernel = _make_fused_kernel(n_mid)
        grid = (n_tiles,)
        in_specs = [
            pl.BlockSpec((bm_tile, CIPHER), lambda i: (i, 0)),   # c tile
            pl.BlockSpec((bm_tile, KEY), lambda i: (i, 0)),      # k tile
            pl.BlockSpec((CIPHER, H), lambda i: (0, 0)),         # W0_c (resident)
            pl.BlockSpec((KEY, H), lambda i: (0, 0)),            # W0_k (resident)
            pl.BlockSpec((1, H), lambda i: (0, 0)),              # b0
        ]
        args = [c, k, w0c, w0k, b0]
        if n_mid > 0:
            in_specs += [
                pl.BlockSpec((n_mid, H, H), lambda i: (0, 0, 0)),   # whole mid W stack
                pl.BlockSpec((n_mid, 1, H), lambda i: (0, 0, 0)),   # whole mid b stack
            ]
            args += [wm, bm]
        in_specs += [
            pl.BlockSpec((H, P), lambda i: (0, 0)),              # W_last
            pl.BlockSpec((1, P), lambda i: (0, 0)),              # b_last
        ]
        args += [wl, bl]
        out_spec = pl.BlockSpec((bm_tile, P), lambda i: (i, 0))
        scratch = []
        dim_sem = ("parallel",)
        weight_bytes = ((IN + 1) * H + n_mid * (H * H + H) + H * P + P) * w_isz
        vmem_need = act_bytes + fixed_w_bytes + mid_stack_bytes
    else:
        # Streaming fallback: mid stack too big for VMEM — one slab per step.
        # (If DMA latency is still exposed on v5e/v6e's 128 MiB, a 3-deep
        #  pipeline_mode=pl.Buffered(3) on the wm spec is the next lever.)
        kernel = _stream_kernel
        grid = (n_tiles, n_mid)
        in_specs = [
            pl.BlockSpec((bm_tile, CIPHER), lambda i, d: (i, 0)),
            pl.BlockSpec((bm_tile, KEY), lambda i, d: (i, 0)),
            pl.BlockSpec((CIPHER, H), lambda i, d: (0, 0)),
            pl.BlockSpec((KEY, H), lambda i, d: (0, 0)),
            pl.BlockSpec((1, H), lambda i, d: (0, 0)),
            pl.BlockSpec((pl.Squeezed(), H, H), lambda i, d: (d, 0, 0)),  # mid W slab d
            pl.BlockSpec((pl.Squeezed(), 1, H), lambda i, d: (d, 0, 0)),  # mid b slab d
            pl.BlockSpec((H, P), lambda i, d: (0, 0)),
            pl.BlockSpec((1, P), lambda i, d: (0, 0)),
        ]
        args = [c, k, w0c, w0k, b0, wm, bm, wl, bl]
        out_spec = pl.BlockSpec((bm_tile, P), lambda i, d: (i, 0))
        scratch = [pltpu.VMEM((bm_tile, H), jnp.float32)]      # hidden activation
        dim_sem = ("parallel", "arbitrary")
        # mid weights are re-fetched once per batch tile (index resets with i)
        weight_bytes = (((IN + 1) * H + H * P + P) * w_isz
                        + n_tiles * n_mid * (H * H + H) * w_isz)
        vmem_need = act_bytes + fixed_w_bytes + mid_slab_bytes

    flops = 2 * B_pad * (IN * H + n_mid * H * H + H * P)
    bytes_accessed = B_pad * (IN * a_isz + P * a_isz) + weight_bytes
    cost = pl.CostEstimate(flops=flops,
                           transcendentals=B_pad * P,
                           bytes_accessed=bytes_accessed)

    vmem_limit = int(min(0.9 * cap,
                         max(int(vmem_need * 1.25) + (1 << 20), 32 << 20)))
    compiler_params = pltpu.CompilerParams(
        dimension_semantics=dim_sem,
        vmem_limit_bytes=vmem_limit)

    out = pl.pallas_call(
        kernel,
        out_shape=jax.ShapeDtypeStruct((B_pad, P), c.dtype),
        grid_spec=pltpu.PrefetchScalarGridSpec(
            num_scalar_prefetch=0,
            grid=grid,
            in_specs=in_specs,
            out_specs=out_spec,
            scratch_shapes=scratch,
        ),
        compiler_params=compiler_params,
        cost_estimate=cost,
    )(*args)

    return out[:B]


# ----------------------------------------------------------------------------
# Params / reference / demo
# ----------------------------------------------------------------------------

def init_params(key, cipher, key_bits, hidden, plain, depth):
    """Deterministic init, PyTorch-Linear-style uniform(-1/sqrt(fan_in), +)."""
    ks = jax.random.split(key, 6)
    in_dim = cipher + key_bits

    def u(k, shape, fan_in):
        bound = 1.0 / jnp.sqrt(float(fan_in))
        return jax.random.uniform(k, shape, jnp.float32, -bound, bound)

    w0 = u(ks[0], (in_dim, hidden), in_dim)
    b0 = u(ks[1], (1, hidden), in_dim)
    wm = u(ks[2], (depth - 1, hidden, hidden), hidden)
    bm = u(ks[3], (depth - 1, 1, hidden), hidden)
    wl = u(ks[4], (hidden, plain), hidden)
    bl = u(ks[5], (1, plain), hidden)
    return (w0, b0, wm, bm, wl, bl)


def bob_reference(c, k, params):
    """Pure-JAX reference mirroring the PyTorch forward."""
    w0, b0, wm, bm, wl, bl = params
    x = jnp.concatenate([c, k], axis=-1)
    h = jax.nn.relu(x @ w0 + b0[0])
    for i in range(wm.shape[0]):
        h = jax.nn.relu(h + (h @ wm[i] + bm[i, 0]))
    return jnp.tanh(h @ wl + bl[0])


if __name__ == "__main__":
    # hp.data.cipher=16, hp.data.key=16, hp.data.plain=16
    # hp.bob.hidden=32, hp.bob.depth=3, batch=8
    CIPHER, KEY, PLAIN = 16, 16, 16
    HIDDEN, DEPTH, BATCH = 32, 3, 8

    root = jax.random.PRNGKey(0)
    kc, kk, kp = jax.random.split(root, 3)
    c = jax.random.uniform(kc, (BATCH, CIPHER), jnp.float32, -1.0, 1.0)
    k = jax.random.uniform(kk, (BATCH, KEY), jnp.float32, -1.0, 1.0)
    params = init_params(kp, CIPHER, KEY, HIDDEN, PLAIN, DEPTH)

    # 1) fused path, whole-batch tile
    out = jax.block_until_ready(bob_forward(c, k, params))
    ref = bob_reference(c, k, params)
    assert out.shape == (BATCH, PLAIN)
    assert jnp.allclose(out, ref, atol=1e-5, rtol=1e-5), "mismatch vs reference"

    # 2) fused path, non-divisible batch + multiple batch tiles (padding exercised)
    B2 = 37
    c2 = jax.random.uniform(kc, (B2, CIPHER), jnp.float32, -1.0, 1.0)
    k2 = jax.random.uniform(kk, (B2, KEY), jnp.float32, -1.0, 1.0)
    out2 = jax.block_until_ready(bob_forward(c2, k2, params, bm_tile=16))
    ref2 = bob_reference(c2, k2, params)
    assert out2.shape == (B2, PLAIN)
    assert jnp.allclose(out2, ref2, atol=1e-5, rtol=1e-5), "mismatch (padded batch)"

    # 3) depth == 1: no-mid kernel variant (no dummy zero slab, no mid HBM fetch)
    params_d1 = init_params(kp, CIPHER, KEY, HIDDEN, PLAIN, 1)
    out3 = jax.block_until_ready(bob_forward(c, k, params_d1))
    ref3 = bob_reference(c, k, params_d1)
    assert jnp.allclose(out3, ref3, atol=1e-5, rtol=1e-5), "mismatch (depth==1)"

    # 4) streaming fallback path (forced) — used when the mid stack exceeds VMEM
    out4 = jax.block_until_ready(
        bob_forward(c2, k2, params, bm_tile=16, force_stream=True))
    assert jnp.allclose(out4, ref2, atol=1e-5, rtol=1e-5), "mismatch (streaming path)"

    print("KERNEL_OK")
</pallas_src>

<mosaic_0001>
module attributes {stable_mosaic.version = 11 : i64} {
  func.func @kernel(%arg0: i32, %arg1: memref<8x16xf32, #tpu.memory_space<vmem>>, %arg2: memref<8x16xf32, #tpu.memory_space<vmem>>, %arg3: memref<16x32xf32, #tpu.memory_space<vmem>>, %arg4: memref<16x32xf32, #tpu.memory_space<vmem>>, %arg5: memref<1x32xf32, #tpu.memory_space<vmem>>, %arg6: memref<2x32x32xf32, #tpu.memory_space<vmem>>, %arg7: memref<2x1x32xf32, #tpu.memory_space<vmem>>, %arg8: memref<32x16xf32, #tpu.memory_space<vmem>>, %arg9: memref<1x16xf32, #tpu.memory_space<vmem>>, %arg10: memref<8x16xf32, #tpu.memory_space<vmem>>) attributes {dimension_semantics = [#tpu.dimension_semantics<parallel>], iteration_bounds = array<i64: 1>, scalar_prefetch = 0 : i64, scratch_operands = 0 : i64, tpu.core_type = #tpu.core_type<tc>, window_params = [{transform_indices = @transform_0, window_bounds = array<i64: 8, 16>}, {transform_indices = @transform_1, window_bounds = array<i64: 8, 16>}, {pipeline_mode = #tpu.pipeline_mode<synchronous>, transform_indices = @transform_2, window_bounds = array<i64: 16, 32>}, {pipeline_mode = #tpu.pipeline_mode<synchronous>, transform_indices = @transform_3, window_bounds = array<i64: 16, 32>}, {pipeline_mode = #tpu.pipeline_mode<synchronous>, transform_indices = @transform_4, window_bounds = array<i64: 1, 32>}, {pipeline_mode = #tpu.pipeline_mode<synchronous>, transform_indices = @transform_5, window_bounds = array<i64: 2, 32, 32>}, {pipeline_mode = #tpu.pipeline_mode<synchronous>, transform_indices = @transform_6, window_bounds = array<i64: 2, 1, 32>}, {pipeline_mode = #tpu.pipeline_mode<synchronous>, transform_indices = @transform_7, window_bounds = array<i64: 32, 16>}, {pipeline_mode = #tpu.pipeline_mode<synchronous>, transform_indices = @transform_8, window_bounds = array<i64: 1, 16>}, {transform_indices = @transform_9, window_bounds = array<i64: 8, 16>}]} {
    %c0 = arith.constant 0 : index
    %c0_0 = arith.constant 0 : index
    %0 = vector.load %arg1[%c0, %c0_0] : memref<8x16xf32, #tpu.memory_space<vmem>>, vector<8x16xf32>
    %c0_1 = arith.constant 0 : index
    %c0_2 = arith.constant 0 : index
    %1 = vector.load %arg3[%c0_1, %c0_2] : memref<16x32xf32, #tpu.memory_space<vmem>>, vector<16x32xf32>
    %cst = arith.constant dense<0.000000e+00> : vector<8x32xf32>
    %2 = tpu.matmul %0, %1, %cst {dimension_numbers = #tpu.dot_dimension_numbers<[1], [0], [0], [1], [0, 0, 1, 1], [], []>} : vector<8x16xf32>, vector<16x32xf32>, vector<8x32xf32> -> vector<8x32xf32>
    %c0_3 = arith.constant 0 : index
    %c0_4 = arith.constant 0 : index
    %3 = vector.load %arg2[%c0_3, %c0_4] : memref<8x16xf32, #tpu.memory_space<vmem>>, vector<8x16xf32>
    %c0_5 = arith.constant 0 : index
    %c0_6 = arith.constant 0 : index
    %4 = vector.load %arg4[%c0_5, %c0_6] : memref<16x32xf32, #tpu.memory_space<vmem>>, vector<16x32xf32>
    %cst_7 = arith.constant dense<0.000000e+00> : vector<8x32xf32>
    %5 = tpu.matmul %3, %4, %cst_7 {dimension_numbers = #tpu.dot_dimension_numbers<[1], [0], [0], [1], [0, 0, 1, 1], [], []>} : vector<8x16xf32>, vector<16x32xf32>, vector<8x32xf32> -> vector<8x32xf32>
    %6 = arith.addf %2, %5 : vector<8x32xf32>
    %c0_8 = arith.constant 0 : index
    %c0_9 = arith.constant 0 : index
    %7 = vector.load %arg5[%c0_8, %c0_9] : memref<1x32xf32, #tpu.memory_space<vmem>>, vector<1x32xf32>
    %8 = vector.broadcast %7 : vector<1x32xf32> to vector<8x32xf32>
    %9 = arith.addf %6, %8 : vector<8x32xf32>
    %cst_10 = arith.constant 0.000000e+00 : f32
    %10 = vector.broadcast %cst_10 : f32 to vector<8x32xf32>
    %11 = arith.maximumf %9, %10 : vector<8x32xf32>
    %c0_i32 = arith.constant 0 : i32
    %12 = arith.index_cast %c0_i32 : i32 to index
    %c0_11 = arith.constant 0 : index
    %c0_12 = arith.constant 0 : index
    %13 = vector.load %arg6[%12, %c0_11, %c0_12] : memref<2x32x32xf32, #tpu.memory_space<vmem>>, vector<1x32x32xf32>
    %14 = vector.shape_cast %13 : vector<1x32x32xf32> to vector<32x32xf32>
    %cst_13 = arith.constant dense<0.000000e+00> : vector<8x32xf32>
    %15 = tpu.matmul %11, %14, %cst_13 {dimension_numbers = #tpu.dot_dimension_numbers<[1], [0], [0], [1], [0, 0, 1, 1], [], []>} : vector<8x32xf32>, vector<32x32xf32>, vector<8x32xf32> -> vector<8x32xf32>
    %16 = arith.index_cast %c0_i32 : i32 to index
    %c0_14 = arith.constant 0 : index
    %c0_15 = arith.constant 0 : index
    %17 = vector.load %arg7[%16, %c0_14, %c0_15] : memref<2x1x32xf32, #tpu.memory_space<vmem>>, vector<1x1x32xf32>
    %18 = vector.shape_cast %17 : vector<1x1x32xf32> to vector<1x32xf32>
    %19 = vector.broadcast %18 : vector<1x32xf32> to vector<8x32xf32>
    %20 = arith.addf %15, %19 : vector<8x32xf32>
    %21 = arith.addf %11, %20 : vector<8x32xf32>
    %cst_16 = arith.constant 0.000000e+00 : f32
    %22 = vector.broadcast %cst_16 : f32 to vector<8x32xf32>
    %23 = arith.maximumf %21, %22 : vector<8x32xf32>
    %c1_i32 = arith.constant 1 : i32
    %24 = arith.index_cast %c1_i32 : i32 to index
    %c0_17 = arith.constant 0 : index
    %c0_18 = arith.constant 0 : index
    %25 = vector.load %arg6[%24, %c0_17, %c0_18] : memref<2x32x32xf32, #tpu.memory_space<vmem>>, vector<1x32x32xf32>
    %26 = vector.shape_cast %25 : vector<1x32x32xf32> to vector<32x32xf32>
    %cst_19 = arith.constant dense<0.000000e+00> : vector<8x32xf32>
    %27 = tpu.matmul %23, %26, %cst_19 {dimension_numbers = #tpu.dot_dimension_numbers<[1], [0], [0], [1], [0, 0, 1, 1], [], []>} : vector<8x32xf32>, vector<32x32xf32>, vector<8x32xf32> -> vector<8x32xf32>
    %28 = arith.index_cast %c1_i32 : i32 to index
    %c0_20 = arith.constant 0 : index
    %c0_21 = arith.constant 0 : index
    %29 = vector.load %arg7[%28, %c0_20, %c0_21] : memref<2x1x32xf32, #tpu.memory_space<vmem>>, vector<1x1x32xf32>
    %30 = vector.shape_cast %29 : vector<1x1x32xf32> to vector<1x32xf32>
    %31 = vector.broadcast %30 : vector<1x32xf32> to vector<8x32xf32>
    %32 = arith.addf %27, %31 : vector<8x32xf32>
    %33 = arith.addf %23, %32 : vector<8x32xf32>
    %cst_22 = arith.constant 0.000000e+00 : f32
    %34 = vector.broadcast %cst_22 : f32 to vector<8x32xf32>
    %35 = arith.maximumf %33, %34 : vector<8x32xf32>
    %c2_i32 = arith.constant 2 : i32
    %c0_23 = arith.constant 0 : index
    %c0_24 = arith.constant 0 : index
    %36 = vector.load %arg8[%c0_23, %c0_24] : memref<32x16xf32, #tpu.memory_space<vmem>>, vector<32x16xf32>
    %cst_25 = arith.constant dense<0.000000e+00> : vector<8x16xf32>
    %37 = tpu.matmul %35, %36, %cst_25 {dimension_numbers = #tpu.dot_dimension_numbers<[1], [0], [0], [1], [0, 0, 1, 1], [], []>} : vector<8x32xf32>, vector<32x16xf32>, vector<8x16xf32> -> vector<8x16xf32>
    %c0_26 = arith.constant 0 : index
    %c0_27 = arith.constant 0 : index
    %38 = vector.load %arg9[%c0_26, %c0_27] : memref<1x16xf32, #tpu.memory_space<vmem>>, vector<1x16xf32>
    %39 = vector.broadcast %38 : vector<1x16xf32> to vector<8x16xf32>
    %40 = arith.addf %37, %39 : vector<8x16xf32>
    %41 = math.tanh %40 : vector<8x16xf32>
    %c0_28 = arith.constant 0 : index
    %c0_29 = arith.constant 0 : index
    %42 = vector.load %arg10[%c0_28, %c0_29] : memref<8x16xf32, #tpu.memory_space<vmem>>, vector<8x16xf32>
    tpu.vector_store %arg10[%c0_28, %c0_29], %41 {strides = array<i32>} : memref<8x16xf32, #tpu.memory_space<vmem>>, vector<8x16xf32>,
    return
  }
  func.func @transform_0(%arg0: i32) -> (i32, i32) {
    %c0_i32 = arith.constant 0 : i32
    %c0_i32_0 = arith.constant 0 : i32
    return %arg0, %c0_i32 : i32, i32
  }
  func.func @transform_1(%arg0: i32) -> (i32, i32) {
    %c0_i32 = arith.constant 0 : i32
    %c0_i32_0 = arith.constant 0 : i32
    return %arg0, %c0_i32 : i32, i32
  }
  func.func @transform_2(%arg0: i32) -> (i32, i32) {
    %c0_i32 = arith.constant 0 : i32
    %c0_i32_0 = arith.constant 0 : i32
    %c0_i32_1 = arith.constant 0 : i32
    return %c0_i32, %c0_i32_0 : i32, i32
  }
  func.func @transform_3(%arg0: i32) -> (i32, i32) {
    %c0_i32 = arith.constant 0 : i32
    %c0_i32_0 = arith.constant 0 : i32
    %c0_i32_1 = arith.constant 0 : i32
    return %c0_i32, %c0_i32_0 : i32, i32
  }
  func.func @transform_4(%arg0: i32) -> (i32, i32) {
    %c0_i32 = arith.constant 0 : i32
    %c0_i32_0 = arith.constant 0 : i32
    %c0_i32_1 = arith.constant 0 : i32
    return %c0_i32, %c0_i32_0 : i32, i32
  }
  func.func @transform_5(%arg0: i32) -> (i32, i32, i32) {
    %c0_i32 = arith.constant 0 : i32
    %c0_i32_0 = arith.constant 0 : i32
    %c0_i32_1 = arith.constant 0 : i32
    %c0_i32_2 = arith.constant 0 : i32
    return %c0_i32, %c0_i32_0, %c0_i32_1 : i32, i32, i32
  }
  func.func @transform_6(%arg0: i32) -> (i32, i32, i32) {
    %c0_i32 = arith.constant 0 : i32
    %c0_i32_0 = arith.constant 0 : i32
    %c0_i32_1 = arith.constant 0 : i32
    %c0_i32_2 = arith.constant 0 : i32
    return %c0_i32, %c0_i32_0, %c0_i32_1 : i32, i32, i32
  }
  func.func @transform_7(%arg0: i32) -> (i32, i32) {
    %c0_i32 = arith.constant 0 : i32
    %c0_i32_0 = arith.constant 0 : i32
    %c0_i32_1 = arith.constant 0 : i32
    return %c0_i32, %c0_i32_0 : i32, i32
  }
  func.func @transform_8(%arg0: i32) -> (i32, i32) {
    %c0_i32 = arith.constant 0 : i32
    %c0_i32_0 = arith.constant 0 : i32
    %c0_i32_1 = arith.constant 0 : i32
    return %c0_i32, %c0_i32_0 : i32, i32
  }
  func.func @transform_9(%arg0: i32) -> (i32, i32) {
    %c0_i32 = arith.constant 0 : i32
    %c0_i32_0 = arith.constant 0 : i32
    return %arg0, %c0_i32 : i32, i32
  }
}

</mosaic_0001>

<llo_original>
// kernel: tpu_custom_call.1
$region0: #{tpu_custom_call.1}
  #allocation0 [shape = 'u32[]', space=smem, size = 0x4, offset = 0x4, fixed_abs, tag = 'smem constant byte address 0x4 - core index']
  #allocation1 [shape = 'u32[144,128]{1,0:T(1,128)}', space=vmem, size = 0x12000, scoped, tag = 'internal scratch']
  %s0 = inlined_call_operand.vmem [shape: f32[8,16], index: 0, kind: input, shape index: {}]
  %s1 = inlined_call_operand.vmem [shape: f32[8,16], index: 1, kind: input, shape index: {}]
  %s2 = inlined_call_operand.vmem [shape: f32[16,32], index: 2, kind: input, shape index: {}]
  %s3 = inlined_call_operand.vmem [shape: f32[16,32], index: 3, kind: input, shape index: {}]
  %s4 = inlined_call_operand.vmem [shape: f32[1,32], index: 4, kind: input, shape index: {}]
  %s5 = inlined_call_operand.hbm [shape: f32[2,32,32], index: 5, kind: input, shape index: {}]
  %s6 = inlined_call_operand.vmem [shape: f32[2,1,32], index: 6, kind: input, shape index: {}]
  %s7 = inlined_call_operand.vmem [shape: f32[32,16], index: 7, kind: input, shape index: {}]
  %s8 = inlined_call_operand.vmem [shape: f32[1,16], index: 8, kind: input, shape index: {}]
  %s9 = inlined_call_operand.hbm [shape: f32[8,16], index: 9, kind: output, shape index: {}]
  %s10 = sld [smem:[#allocation0]]
  $region50: #{tpu_custom_call.1} parent=0
    _
  %s12 = ssub.s32 1, %s10
  %s13 = scalar_select 0, %s12, %s10
  $region1: #{tpu_custom_call.1} parent=0
    #allocation2 [shape = 'u8[32768]{0}', space=vmem, size = 0x8000, scoped, tag = 'input window, operand 5, single buffered']
    #allocation3 [shape = 's32[1]{0}', space=sflag, size = 0x4, scoped, tag = 'scoped memory for tpu_custom_call.1']
    #allocation4 [shape = 's32[1]{0}', space=sflag, size = 0x4, scoped, tag = 'scoped memory for tpu_custom_call.1']
    #allocation5 [shape = 'u8[4096]{0}', space=vmem, size = 0x1000, scoped, tag = 'output window, operand 0, single buffered']
    %14 = vsyncpa [#allocation3], 0
    %15 = vsyncpa [#allocation4], 0
    // Predicated region
    $region2: #{tpu_custom_call.1} parent=1 // pred_check
      _
    $region3: #{tpu_custom_call.1} parent=1 // pred_check_branch
      %17 = sbr.rel (0) target = $region5
    $region4: #{tpu_custom_call.1} parent=1 // pred_region
      _
    $region5: #{tpu_custom_call.1} parent=1 // pred_fallthru
      _
    // Predicated region
    $region6: #{tpu_custom_call.1} parent=1 // pred_check
      _
    $region7: #{tpu_custom_call.1} parent=1 // pred_check_branch
      %19 = sbr.rel (0) target = $region9
    $region8: #{tpu_custom_call.1} parent=1 // pred_region
      _
    $region9: #{tpu_custom_call.1} parent=1 // pred_fallthru
      _
    // Predicated region
    $region10: #{tpu_custom_call.1} parent=1 // pred_check
      _
    $region11: #{tpu_custom_call.1} parent=1 // pred_check_branch
      %21 = sbr.rel (0) target = $region13
    $region12: #{tpu_custom_call.1} parent=1 // pred_region
      _
    $region13: #{tpu_custom_call.1} parent=1 // pred_fallthru
      _
    // Predicated region
    $region14: #{tpu_custom_call.1} parent=1 // pred_check
      _
    $region15: #{tpu_custom_call.1} parent=1 // pred_check_branch
      %23 = sbr.rel (0) target = $region17
    $region16: #{tpu_custom_call.1} parent=1 // pred_region
      _
    $region17: #{tpu_custom_call.1} parent=1 // pred_fallthru
      _
    // Predicated region
    $region18: #{tpu_custom_call.1} parent=1 // pred_check
      _
    $region19: #{tpu_custom_call.1} parent=1 // pred_check_branch
      %25 = sbr.rel (0) target = $region21
    $region20: #{tpu_custom_call.1} parent=1 // pred_region
      _
    $region21: #{tpu_custom_call.1} parent=1 // pred_fallthru
      _
    // Predicated region
    $region22: #{tpu_custom_call.1} parent=1 // pred_check
      _
    $region23: #{tpu_custom_call.1} parent=1 // pred_check_branch
      %27 = sbr.rel (0) target = $region25
    $region24: #{tpu_custom_call.1} parent=1 // pred_region
      %s29 = ssub.s32 1024, 1024
      %30 = vsyncadd [#allocation3], %s29
      %s31 = sshll.u32 [#allocation2], 4
      %s32 = int_to_ptr.vmem [resolvable:$true] %s31
      %37 = dma.hbm_to_vmem [thread:$0]  %s5, 1024, %s32, [#allocation3], 128, 128, 8
    $region25: #{tpu_custom_call.1} parent=1 // pred_fallthru
      _
    // Predicated region
    $region26: #{tpu_custom_call.1} parent=1 // pred_check
      _
    $region27: #{tpu_custom_call.1} parent=1 // pred_check_branch
      %39 = sbr.rel (0) target = $region29
    $region28: #{tpu_custom_call.1} parent=1 // pred_region
      _
    $region29: #{tpu_custom_call.1} parent=1 // pred_fallthru
      _
    // Predicated region
    $region30: #{tpu_custom_call.1} parent=1 // pred_check
      _
    $region31: #{tpu_custom_call.1} parent=1 // pred_check_branch
      %41 = sbr.rel (0) target = $region33
    $region32: #{tpu_custom_call.1} parent=1 // pred_region
      _
    $region33: #{tpu_custom_call.1} parent=1 // pred_fallthru
      _
    // Predicated region
    $region34: #{tpu_custom_call.1} parent=1 // pred_check
      _
    $region35: #{tpu_custom_call.1} parent=1 // pred_check_branch
      %43 = sbr.rel (0) target = $region37
    $region36: #{tpu_custom_call.1} parent=1 // pred_region
      _
    $region37: #{tpu_custom_call.1} parent=1 // pred_fallthru
      _
    // Predicated region
    $region38: #{tpu_custom_call.1} parent=1 // pred_check
      _
    $region39: #{tpu_custom_call.1} parent=1 // pred_check_branch
      %45 = sbr.rel (0) target = $region41
    $region40: #{tpu_custom_call.1} parent=1 // pred_region
      %46 = dma.done [#allocation3], 1024
    $region41: #{tpu_custom_call.1} parent=1 // pred_fallthru
      _
    %v47 = vld [vmem:[%s0] sm:$0xff]
    %v48 = vld [vmem:[%s2] sm:$0xff]
    %v49 = vld [vmem:[%s2 + $0x8] sm:$0xff]
    %v50 = vld [vmem:[%s1] sm:$0xff]
    %v51 = vld [vmem:[%s3] sm:$0xff]
    %v52 = vld [vmem:[%s3 + $0x8] sm:$0xff]
    %vm53 = vcmask 130048
    %v55 = vsel %vm53, %v50, 0
    %57 = vmatprep.subr.mxu0 0.0
    %58 = vmatpush1.msra.mxu0 0.0
    %59 = vmatprep.subr.mxu0 0.0
    %60 = vmatpush1.msra.mxu0 0.0
    %61 = vmatprep.subr.mxu0 0.0
    %62 = vmatpush1.msra.mxu0 0.0
    %63 = vmatprep.subr.mxu0 0.0
    %64 = vmatpush1.msra.mxu0 0.0
    %65 = vmatprep.subr.mxu0 0.0
    %66 = vmatpush1.msra.mxu0 0.0
    %67 = vmatprep.subr.mxu0 0.0
    %68 = vmatpush1.msra.mxu0 0.0
    %69 = vmatprep.subr.mxu0 0.0
    %70 = vmatpush1.msra.mxu0 0.0
    %71 = vmatprep.subr.mxu0 0.0
    %72 = vmatpush1.msra.mxu0 0.0
    %73 = vmatprep.subr.mxu0 0.0
    %74 = vmatpush1.msra.mxu0 0.0
    %75 = vmatprep.subr.mxu0 0.0
    %76 = vmatpush1.msra.mxu0 0.0
    %77 = vmatprep.subr.mxu0 0.0
    %78 = vmatpush1.msra.mxu0 0.0
    %79 = vmatprep.subr.mxu0 0.0
    %80 = vmatpush1.msra.mxu0 0.0
    %81 = vmatprep.subr.mxu0 0.0
    %82 = vmatpush1.msra.mxu0 0.0
    %83 = vmatprep.subr.mxu0 0.0
    %84 = vmatpush1.msra.mxu0 0.0
    %85 = vmatprep.subr.mxu0 0.0
    %86 = vmatpush1.msra.mxu0 %v52
    %87 = vmatprep.subr.mxu0 0.0
    %88 = vmatpush1.msra.mxu0 %v51
    %89 = vmatprep.subr.mxu0 0.0
    %90 = vmatpush2.msra.mxu0 0.0
    %91 = vmatprep.subr.mxu0 0.0
    %92 = vmatpush2.msra.mxu0 0.0
    %93 = vmatprep.subr.mxu0 0.0
    %94 = vmatpush2.msra.mxu0 0.0
    %95 = vmatprep.subr.mxu0 0.0
    %96 = vmatpush2.msra.mxu0 0.0
    %97 = vmatprep.subr.mxu0 0.0
    %98 = vmatpush2.msra.mxu0 0.0
    %99 = vmatprep.subr.mxu0 0.0
    %100 = vmatpush2.msra.mxu0 0.0
    %101 = vmatprep.subr.mxu0 0.0
    %102 = vmatpush2.msra.mxu0 0.0
    %103 = vmatprep.subr.mxu0 0.0
    %104 = vmatpush2.msra.mxu0 0.0
    %105 = vmatprep.subr.mxu0 0.0
    %106 = vmatpush2.msra.mxu0 0.0
    %107 = vmatprep.subr.mxu0 0.0
    %108 = vmatpush2.msra.mxu0 0.0
    %109 = vmatprep.subr.mxu0 0.0
    %110 = vmatpush2.msra.mxu0 0.0
    %111 = vmatprep.subr.mxu0 0.0
    %112 = vmatpush2.msra.mxu0 0.0
    %113 = vmatprep.subr.mxu0 0.0
    %114 = vmatpush2.msra.mxu0 0.0
    %115 = vmatprep.subr.mxu0 0.0
    %116 = vmatpush2.msra.mxu0 0.0
    %117 = vmatprep.subr.mxu0 0.0
    %118 = vmatpush2.msra.mxu0 0.0
    %119 = vmatprep.subr.mxu0 0.0
    %120 = vmatpush2.msra.mxu0 0.0
    %121 = vmatprep.mubr.f32.mxu0 0.0
    %122 = vmatmul.mubr.f32.gmra.mxu0 %v55
    %v123 = vpop.f32.mrf.mxu0
    %v124 = vadd.f32 0.0, %v123
    %v125 = vpop.f32.mrf.mxu0
    %126 = vdwg.mxu0
    %v128 = vsel %vm53, %v47, 0
    %130 = vmatprep.subr.mxu0 0.0
    %131 = vmatpush1.msra.mxu0 0.0
    %132 = vmatprep.subr.mxu0 0.0
    %133 = vmatpush1.msra.mxu0 0.0
    %134 = vmatprep.subr.mxu0 0.0
    %135 = vmatpush1.msra.mxu0 0.0
    %136 = vmatprep.subr.mxu0 0.0
    %137 = vmatpush1.msra.mxu0 0.0
    %138 = vmatprep.subr.mxu0 0.0
    %139 = vmatpush1.msra.mxu0 0.0
    %140 = vmatprep.subr.mxu0 0.0
    %141 = vmatpush1.msra.mxu0 0.0
    %142 = vmatprep.subr.mxu0 0.0
    %143 = vmatpush1.msra.mxu0 0.0
    %144 = vmatprep.subr.mxu0 0.0
    %145 = vmatpush1.msra.mxu0 0.0
    %146 = vmatprep.subr.mxu0 0.0
    %147 = vmatpush1.msra.mxu0 0.0
    %148 = vmatprep.subr.mxu0 0.0
    %149 = vmatpush1.msra.mxu0 0.0
    %150 = vmatprep.subr.mxu0 0.0
    %151 = vmatpush1.msra.mxu0 0.0
    %152 = vmatprep.subr.mxu0 0.0
    %153 = vmatpush1.msra.mxu0 0.0
    %154 = vmatprep.subr.mxu0 0.0
    %155 = vmatpush1.msra.mxu0 0.0
    %156 = vmatprep.subr.mxu0 0.0
    %157 = vmatpush1.msra.mxu0 0.0
    %158 = vmatprep.subr.mxu0 0.0
    %159 = vmatpush1.msra.mxu0 %v49
    %160 = vmatprep.subr.mxu0 0.0
    %161 = vmatpush1.msra.mxu0 %v48
    %162 = vmatprep.subr.mxu0 0.0
    %163 = vmatpush2.msra.mxu0 0.0
    %164 = vmatprep.subr.mxu0 0.0
    %165 = vmatpush2.msra.mxu0 0.0
    %166 = vmatprep.subr.mxu0 0.0
    %167 = vmatpush2.msra.mxu0 0.0
    %168 = vmatprep.subr.mxu0 0.0
    %169 = vmatpush2.msra.mxu0 0.0
    %170 = vmatprep.subr.mxu0 0.0
    %171 = vmatpush2.msra.mxu0 0.0
    %172 = vmatprep.subr.mxu0 0.0
    %173 = vmatpush2.msra.mxu0 0.0
    %174 = vmatprep.subr.mxu0 0.0
    %175 = vmatpush2.msra.mxu0 0.0
    %176 = vmatprep.subr.mxu0 0.0
    %177 = vmatpush2.msra.mxu0 0.0
    %178 = vmatprep.subr.mxu0 0.0
    %179 = vmatpush2.msra.mxu0 0.0
    %180 = vmatprep.subr.mxu0 0.0
    %181 = vmatpush2.msra.mxu0 0.0
    %182 = vmatprep.subr.mxu0 0.0
    %183 = vmatpush2.msra.mxu0 0.0
    %184 = vmatprep.subr.mxu0 0.0
    %185 = vmatpush2.msra.mxu0 0.0
    %186 = vmatprep.subr.mxu0 0.0
    %187 = vmatpush2.msra.mxu0 0.0
    %188 = vmatprep.subr.mxu0 0.0
    %189 = vmatpush2.msra.mxu0 0.0
    %190 = vmatprep.subr.mxu0 0.0
    %191 = vmatpush2.msra.mxu0 0.0
    %192 = vmatprep.subr.mxu0 0.0
    %193 = vmatpush2.msra.mxu0 0.0
    %194 = vmatprep.mubr.f32.mxu0 0.0
    %195 = vmatmul.mubr.f32.gmra.mxu0 %v128
    %v196 = vpop.f32.mrf.mxu0
    %v197 = vadd.f32 %v124, %v196
    %v198 = vpop.f32.mrf.mxu0
    %199 = vdwg.mxu0
    %v200 = vld [vmem:[%s4] sm:$0x1]
    %v202 = vlaneseq
    %v203 = vshrl.u32 %v202, 7
    %v204 = vsub.s32 0, %v203
    %v205 = vrot.slane %v200, %v204
    %v207 = vadd.f32 %v197, %v205
    %v208 = vmax.f32 %v207, 0.0
    %v209 = vld [vmem:[#allocation2] sm:$0xff]
    %v210 = vld [vmem:[#allocation2 + $0x8] sm:$0xff]
    %v211 = vld [vmem:[#allocation2 + $0x10] sm:$0xff]
    %v212 = vld [vmem:[#allocation2 + $0x18] sm:$0xff]
    %v213 = vld [vmem:[%s6] sm:$0x1]
    %v215 = vlaneseq
    %v216 = vshrl.u32 %v215, 7
    %v217 = vsub.s32 0, %v216
    %v218 = vrot.slane %v213, %v217
    %vm220 = vcmask 261120
    %v222 = vsel %vm220, %v208, 0
    %224 = vmatprep.subr.mxu0 0.0
    %225 = vmatpush1.msra.mxu0 0.0
    %226 = vmatprep.subr.mxu0 0.0
    %227 = vmatpush1.msra.mxu0 0.0
    %228 = vmatprep.subr.mxu0 0.0
    %229 = vmatpush1.msra.mxu0 0.0
    %230 = vmatprep.subr.mxu0 0.0
    %231 = vmatpush1.msra.mxu0 0.0
    %232 = vmatprep.subr.mxu0 0.0
    %233 = vmatpush1.msra.mxu0 0.0
    %234 = vmatprep.subr.mxu0 0.0
    %235 = vmatpush1.msra.mxu0 0.0
    %236 = vmatprep.subr.mxu0 0.0
    %237 = vmatpush1.msra.mxu0 0.0
    %238 = vmatprep.subr.mxu0 0.0
    %239 = vmatpush1.msra.mxu0 0.0
    %240 = vmatprep.subr.mxu0 0.0
    %241 = vmatpush1.msra.mxu0 0.0
    %242 = vmatprep.subr.mxu0 0.0
    %243 = vmatpush1.msra.mxu0 0.0
    %244 = vmatprep.subr.mxu0 0.0
    %245 = vmatpush1.msra.mxu0 0.0
    %246 = vmatprep.subr.mxu0 0.0
    %247 = vmatpush1.msra.mxu0 0.0
    %248 = vmatprep.subr.mxu0 0.0
    %249 = vmatpush1.msra.mxu0 %v212
    %250 = vmatprep.subr.mxu0 0.0
    %251 = vmatpush1.msra.mxu0 %v211
    %252 = vmatprep.subr.mxu0 0.0
    %253 = vmatpush1.msra.mxu0 %v210
    %254 = vmatprep.subr.mxu0 0.0
    %255 = vmatpush1.msra.mxu0 %v209
    %256 = vmatprep.subr.mxu0 0.0
    %257 = vmatpush2.msra.mxu0 0.0
    %258 = vmatprep.subr.mxu0 0.0
    %259 = vmatpush2.msra.mxu0 0.0
    %260 = vmatprep.subr.mxu0 0.0
    %261 = vmatpush2.msra.mxu0 0.0
    %262 = vmatprep.subr.mxu0 0.0
    %263 = vmatpush2.msra.mxu0 0.0
    %264 = vmatprep.subr.mxu0 0.0
    %265 = vmatpush2.msra.mxu0 0.0
    %266 = vmatprep.subr.mxu0 0.0
    %267 = vmatpush2.msra.mxu0 0.0
    %268 = vmatprep.subr.mxu0 0.0
    %269 = vmatpush2.msra.mxu0 0.0
    %270 = vmatprep.subr.mxu0 0.0
    %271 = vmatpush2.msra.mxu0 0.0
    %272 = vmatprep.subr.mxu0 0.0
    %273 = vmatpush2.msra.mxu0 0.0
    %274 = vmatprep.subr.mxu0 0.0
    %275 = vmatpush2.msra.mxu0 0.0
    %276 = vmatprep.subr.mxu0 0.0
    %277 = vmatpush2.msra.mxu0 0.0
    %278 = vmatprep.subr.mxu0 0.0
    %279 = vmatpush2.msra.mxu0 0.0
    %280 = vmatprep.subr.mxu0 0.0
    %281 = vmatpush2.msra.mxu0 0.0
    %282 = vmatprep.subr.mxu0 0.0
    %283 = vmatpush2.msra.mxu0 0.0
    %284 = vmatprep.subr.mxu0 0.0
    %285 = vmatpush2.msra.mxu0 0.0
    %286 = vmatprep.subr.mxu0 0.0
    %287 = vmatpush2.msra.mxu0 0.0
    %288 = vmatprep.mubr.f32.mxu0 0.0
    %289 = vmatmul.mubr.f32.gmra.mxu0 %v222
    %v290 = vpop.f32.mrf.mxu0
    %v291 = vadd.f32 %v218, %v290
    %v292 = vpop.f32.mrf.mxu0
    %293 = vdwg.mxu0
    %v294 = vadd.f32 %v208, %v291
    %v295 = vmax.f32 %v294, 0.0
    %s296 = scalar_lea.vmem [#allocation2], 32
    %v297 = vld [vmem:[%s296] sm:$0xff]
    %v298 = vld [vmem:[%s296 + $0x8] sm:$0xff]
    %v299 = vld [vmem:[%s296 + $0x10] sm:$0xff]
    %v300 = vld [vmem:[%s296 + $0x18] sm:$0xff]
    %s301 = scalar_lea.vmem %s6, 1
    %v302 = vld [vmem:[%s301] sm:$0x1]
    %v304 = vlaneseq
    %v305 = vshrl.u32 %v304, 7
    %v306 = vsub.s32 0, %v305
    %v307 = vrot.slane %v302, %v306
    %v310 = vsel %vm220, %v295, 0
    %312 = vmatprep.subr.mxu0 0.0
    %313 = vmatpush1.msra.mxu0 0.0
    %314 = vmatprep.subr.mxu0 0.0
    %315 = vmatpush1.msra.mxu0 0.0
    %316 = vmatprep.subr.mxu0 0.0
    %317 = vmatpush1.msra.mxu0 0.0
    %318 = vmatprep.subr.mxu0 0.0
    %319 = vmatpush1.msra.mxu0 0.0
    %320 = vmatprep.subr.mxu0 0.0
    %321 = vmatpush1.msra.mxu0 0.0
    %322 = vmatprep.subr.mxu0 0.0
    %323 = vmatpush1.msra.mxu0 0.0
    %324 = vmatprep.subr.mxu0 0.0
    %325 = vmatpush1.msra.mxu0 0.0
    %326 = vmatprep.subr.mxu0 0.0
    %327 = vmatpush1.msra.mxu0 0.0
    %328 = vmatprep.subr.mxu0 0.0
    %329 = vmatpush1.msra.mxu0 0.0
    %330 = vmatprep.subr.mxu0 0.0
    %331 = vmatpush1.msra.mxu0 0.0
    %332 = vmatprep.subr.mxu0 0.0
    %333 = vmatpush1.msra.mxu0 0.0
    %334 = vmatprep.subr.mxu0 0.0
    %335 = vmatpush1.msra.mxu0 0.0
    %336 = vmatprep.subr.mxu0 0.0
    %337 = vmatpush1.msra.mxu0 %v300
    %338 = vmatprep.subr.mxu0 0.0
    %339 = vmatpush1.msra.mxu0 %v299
    %340 = vmatprep.subr.mxu0 0.0
    %341 = vmatpush1.msra.mxu0 %v298
    %342 = vmatprep.subr.mxu0 0.0
    %343 = vmatpush1.msra.mxu0 %v297
    %344 = vmatprep.subr.mxu0 0.0
    %345 = vmatpush2.msra.mxu0 0.0
    %346 = vmatprep.subr.mxu0 0.0
    %347 = vmatpush2.msra.mxu0 0.0
    %348 = vmatprep.subr.mxu0 0.0
    %349 = vmatpush2.msra.mxu0 0.0
    %350 = vmatprep.subr.mxu0 0.0
    %351 = vmatpush2.msra.mxu0 0.0
    %352 = vmatprep.subr.mxu0 0.0
    %353 = vmatpush2.msra.mxu0 0.0
    %354 = vmatprep.subr.mxu0 0.0
    %355 = vmatpush2.msra.mxu0 0.0
    %356 = vmatprep.subr.mxu0 0.0
    %357 = vmatpush2.msra.mxu0 0.0
    %358 = vmatprep.subr.mxu0 0.0
    %359 = vmatpush2.msra.mxu0 0.0
    %360 = vmatprep.subr.mxu0 0.0
    %361 = vmatpush2.msra.mxu0 0.0
    %362 = vmatprep.subr.mxu0 0.0
    %363 = vmatpush2.msra.mxu0 0.0
    %364 = vmatprep.subr.mxu0 0.0
    %365 = vmatpush2.msra.mxu0 0.0
    %366 = vmatprep.subr.mxu0 0.0
    %367 = vmatpush2.msra.mxu0 0.0
    %368 = vmatprep.subr.mxu0 0.0
    %369 = vmatpush2.msra.mxu0 0.0
    %370 = vmatprep.subr.mxu0 0.0
    %371 = vmatpush2.msra.mxu0 0.0
    %372 = vmatprep.subr.mxu0 0.0
    %373 = vmatpush2.msra.mxu0 0.0
    %374 = vmatprep.subr.mxu0 0.0
    %375 = vmatpush2.msra.mxu0 0.0
    %376 = vmatprep.mubr.f32.mxu0 0.0
    %377 = vmatmul.mubr.f32.gmra.mxu0 %v310
    %v378 = vpop.f32.mrf.mxu0
    %v379 = vadd.f32 %v307, %v378
    %v380 = vpop.f32.mrf.mxu0
    %381 = vdwg.mxu0
    %v382 = vadd.f32 %v295, %v379
    %v383 = vmax.f32 %v382, 0.0
    %v384 = vld [vmem:[%s7] sm:$0xff]
    %v385 = vld [vmem:[%s7 + $0x8] sm:$0xff]
    %v386 = vld [vmem:[%s7 + $0x10] sm:$0xff]
    %v387 = vld [vmem:[%s7 + $0x18] sm:$0xff]
    %v388 = vld [vmem:[%s8] sm:$0x1]
    %v390 = vlaneseq
    %v391 = vshrl.u32 %v390, 7
    %v392 = vsub.s32 0, %v391
    %v393 = vrot.slane %v388, %v392
    %v396 = vsel %vm220, %v383, 0
    %398 = vmatprep.subr.mxu0 0.0
    %399 = vmatpush1.msra.mxu0 0.0
    %400 = vmatprep.subr.mxu0 0.0
    %401 = vmatpush1.msra.mxu0 0.0
    %402 = vmatprep.subr.mxu0 0.0
    %403 = vmatpush1.msra.mxu0 0.0
    %404 = vmatprep.subr.mxu0 0.0
    %405 = vmatpush1.msra.mxu0 0.0
    %406 = vmatprep.subr.mxu0 0.0
    %407 = vmatpush1.msra.mxu0 0.0
    %408 = vmatprep.subr.mxu0 0.0
    %409 = vmatpush1.msra.mxu0 0.0
    %410 = vmatprep.subr.mxu0 0.0
    %411 = vmatpush1.msra.mxu0 0.0
    %412 = vmatprep.subr.mxu0 0.0
    %413 = vmatpush1.msra.mxu0 0.0
    %414 = vmatprep.subr.mxu0 0.0
    %415 = vmatpush1.msra.mxu0 0.0
    %416 = vmatprep.subr.mxu0 0.0
    %417 = vmatpush1.msra.mxu0 0.0
    %418 = vmatprep.subr.mxu0 0.0
    %419 = vmatpush1.msra.mxu0 0.0
    %420 = vmatprep.subr.mxu0 0.0
    %421 = vmatpush1.msra.mxu0 0.0
    %422 = vmatprep.subr.mxu0 0.0
    %423 = vmatpush1.msra.mxu0 %v387
    %424 = vmatprep.subr.mxu0 0.0
    %425 = vmatpush1.msra.mxu0 %v386
    %426 = vmatprep.subr.mxu0 0.0
    %427 = vmatpush1.msra.mxu0 %v385
    %428 = vmatprep.subr.mxu0 0.0
    %429 = vmatpush1.msra.mxu0 %v384
    %430 = vmatprep.subr.mxu0 0.0
    %431 = vmatpush2.msra.mxu0 0.0
    %432 = vmatprep.subr.mxu0 0.0
    %433 = vmatpush2.msra.mxu0 0.0
    %434 = vmatprep.subr.mxu0 0.0
    %435 = vmatpush2.msra.mxu0 0.0
    %436 = vmatprep.subr.mxu0 0.0
    %437 = vmatpush2.msra.mxu0 0.0
    %438 = vmatprep.subr.mxu0 0.0
    %439 = vmatpush2.msra.mxu0 0.0
    %440 = vmatprep.subr.mxu0 0.0
    %441 = vmatpush2.msra.mxu0 0.0
    %442 = vmatprep.subr.mxu0 0.0
    %443 = vmatpush2.msra.mxu0 0.0
    %444 = vmatprep.subr.mxu0 0.0
    %445 = vmatpush2.msra.mxu0 0.0
    %446 = vmatprep.subr.mxu0 0.0
    %447 = vmatpush2.msra.mxu0 0.0
    %448 = vmatprep.subr.mxu0 0.0
    %449 = vmatpush2.msra.mxu0 0.0
    %450 = vmatprep.subr.mxu0 0.0
    %451 = vmatpush2.msra.mxu0 0.0
    %452 = vmatprep.subr.mxu0 0.0
    %453 = vmatpush2.msra.mxu0 0.0
    %454 = vmatprep.subr.mxu0 0.0
    %455 = vmatpush2.msra.mxu0 0.0
    %456 = vmatprep.subr.mxu0 0.0
    %457 = vmatpush2.msra.mxu0 0.0
    %458 = vmatprep.subr.mxu0 0.0
    %459 = vmatpush2.msra.mxu0 0.0
    %460 = vmatprep.subr.mxu0 0.0
    %461 = vmatpush2.msra.mxu0 0.0
    %462 = vmatprep.mubr.f32.mxu0 0.0
    %463 = vmatmul.mubr.f32.gmra.mxu0 %v396
    %v464 = vpop.f32.mrf.mxu0
    %v465 = vadd.f32 %v393, %v464
    %v466 = vpop.f32.mrf.mxu0
    %467 = vdwg.mxu0
    %v468 = vtanh.pop %v465
    %469 = vst.msk [vmem:[#allocation5] sm:$0xff] %vm53, %v468
    // Predicated region
    $region42: #{tpu_custom_call.1} parent=1 // pred_check
      _
    $region43: #{tpu_custom_call.1} parent=1 // pred_check_branch
      %471 = sbr.rel (0) target = $region45
    $region44: #{tpu_custom_call.1} parent=1 // pred_region
      %s473 = ssub.s32 128, 128
      %474 = vsyncadd [#allocation4], %s473
      %s476 = sshll.u32 [#allocation5], 4
      %s477 = int_to_ptr.vmem [resolvable:$true] %s476
      %479 = dma.vmem_to_hbm [thread:$0]  %s477, 128, %s9, [#allocation4]
    $region45: #{tpu_custom_call.1} parent=1 // pred_fallthru
      _
    // Predicated region
    $region46: #{tpu_custom_call.1} parent=1 // pred_check
      _
    $region47: #{tpu_custom_call.1} parent=1 // pred_check_branch
      %481 = sbr.rel (0) target = $region49
    $region48: #{tpu_custom_call.1} parent=1 // pred_region
      %482 = dma.done [#allocation4], 128
    $region49: #{tpu_custom_call.1} parent=1 // pred_fallthru
      _
    %483 = vsyncpa [#allocation3], 1
    %484 = vsyncpa [#allocation4], 1

</llo_original>
